<compile_context>
chip_gen: v6e
topology: v6e:2x2x1
jax: 0.10.0
libtpu: 0.0.40
codegen_flags: <defaults>
</compile_context>

<pallas_src>
import functools

import jax
import jax.numpy as jnp
from jax.experimental import pallas as pl
from jax.experimental.pallas import tpu as pltpu

GAMMA_NEG = 2.0
GAMMA_POS = 1.0
CLIP = 0.05
EPS = 1e-8


def _round_up(n, m):
    return (n + m - 1) // m * m


def _int_pow(base, n):
    """base ** n for small non-negative integer n via repeated VPU multiplies."""
    n = int(n)
    if n == 0:
        return jnp.ones_like(base)
    out = base
    for _ in range(n - 1):
        out = out * base
    return out


def _asl_kernel(x_ref, y_ref, out_ref, *, gamma_neg, gamma_pos, clip, eps,
                n_rows, row_tile, needs_mask, binary_targets, from_logits):
    x = x_ref[...].astype(jnp.float32)
    if from_logits:
        # Fused sigmoid: EUP op per element, saves a separate XLA pass over x.
        x = jax.nn.sigmoid(x)

    xs_pos = x
    xs_neg = 1.0 - x
    if clip is not None and clip > 0:
        xs_neg = jnp.minimum(xs_neg + clip, 1.0)

    use_focal = (gamma_neg > 0) or (gamma_pos > 0)

    if binary_targets:
        # y is a binarized {0,1} vector: compare in the stored dtype (no f32
        # upcast of y) and select the log argument before the log so only one
        # transcendental per element is issued.
        is_pos = y_ref[...] > 0
        base = jnp.where(is_pos, xs_pos, xs_neg)
        # PyTorch clamps to [eps, 1 - eps]; in f32 1 - 1e-8 rounds to 1.0 and
        # base <= 1 already, so a single max matches exactly and saves a min.
        loss = jnp.log(jnp.maximum(base, eps))
        if use_focal:
            one_m_pt = 1.0 - base
            int_ok = (float(gamma_pos).is_integer() and float(gamma_neg).is_integer()
                      and 0 <= gamma_pos <= 8 and 0 <= gamma_neg <= 8)
            if int_ok:
                w = jnp.where(is_pos,
                              _int_pow(one_m_pt, gamma_pos),
                              _int_pow(one_m_pt, gamma_neg))
            else:
                w = jnp.where(is_pos,
                              jnp.power(one_m_pt, gamma_pos),
                              jnp.power(one_m_pt, gamma_neg))
            loss = loss * w
    else:
        # General (soft-label-safe) formulation, mirrors the PyTorch forward.
        y = y_ref[...].astype(jnp.float32)
        one_m_y = 1.0 - y
        los_pos = y * jnp.log(jnp.maximum(xs_pos, eps))
        los_neg = one_m_y * jnp.log(jnp.maximum(xs_neg, eps))
        loss = los_pos + los_neg
        if use_focal:
            pt = xs_pos * y + xs_neg * one_m_y
            g = gamma_pos * y + gamma_neg * one_m_y
            loss = loss * jnp.power(1.0 - pt, g)

    if needs_mask:
        # Last row-block is partial (inputs are NOT padded in HBM): rows past
        # the true batch hold garbage -> where-select (not multiply) so NaNs
        # cannot leak into the sum.
        row0 = pl.program_id(0) * row_tile
        rows = row0 + jax.lax.broadcasted_iota(jnp.int32, (loss.shape[0], 1), 0)
        loss = jnp.where(rows < n_rows, loss, 0.0)

    # Lane-dense per-tile partial: fold the row axis in groups of 8 sublanes
    # (pure VPU adds, no cross-lane XLU reduce, no scalar SMEM store).  The
    # tiny (num_row_tiles, 8, C) output is summed in JAX.
    nr, nc = loss.shape
    part = jnp.sum(loss.reshape(nr // 8, 8, nc), axis=0)
    out_ref[0] = -part


def _vmem_limit_bytes():
    phys = 64 * 2 ** 20  # conservative default: v7x has 64 MiB VMEM per TensorCore
    try:
        info = pltpu.get_tpu_info()
        phys = int(getattr(info, "vmem_capacity_bytes", phys)) or phys
    except Exception:
        pass
    # Leave >= 24 MiB headroom for compiler-internal scratch; never exceed 96 MiB.
    return int(min(96 * 2 ** 20, max(32 * 2 ** 20, phys - 24 * 2 ** 20)))


def asymmetric_loss(x, y, *, gamma_neg=GAMMA_NEG, gamma_pos=GAMMA_POS,
                    clip=CLIP, eps=EPS, binary_targets=True, from_logits=False,
                    row_tile=None):
    """AsymmetricLoss forward.

    x: probabilities after sigmoid (or raw logits if from_logits=True),
       f32 or bf16, shape (B, C).
    y: multi-label binarized targets; f32 / bf16 / int8 / bool accepted, (B, C).
    binary_targets=True assumes y in {0, 1}; set False if y may hold soft labels
    (soft labels passed with the default flag would be silently binarized).
    """
    assert x.shape == y.shape and x.ndim == 2
    b, c = x.shape
    x_bytes = jnp.dtype(x.dtype).itemsize
    y_bytes = jnp.dtype(y.dtype).itemsize

    # ---- column (lane) tiling: keep full C unless it is very wide ----
    col_tile = c
    if c % 256 == 0:
        while col_tile > 4096 and col_tile % 256 == 0:
            col_tile //= 2
    num_col_tiles = c // col_tile

    # ---- row (sublane) tiling, dtype-aware ----
    if row_tile is None:
        in_bytes_per_row = max(1, col_tile * (x_bytes + y_bytes))
        f32_bytes_per_row = max(1, col_tile * 4)
        rows_by_hbm = (8 * 2 ** 20) // in_bytes_per_row    # ~8 MiB of input per tile
        rows_by_vmem = (4 * 2 ** 20) // f32_bytes_per_row  # ~4 MiB per f32 temporary
        row_tile = min(rows_by_hbm, rows_by_vmem)
    row_tile = int(row_tile)
    if row_tile >= 32:
        # Multiple of 32 rows: no packed-sublane relayout for bf16/int8 tiles.
        row_tile = (row_tile // 32) * 32
    else:
        row_tile = max(8, (row_tile // 8) * 8)
    if row_tile >= b:
        row_tile = _round_up(b, 8)
    num_row_tiles = pl.cdiv(b, row_tile)

    # ---- v7x megacore: try to expose >= 2 parallel grid steps ----
    if num_row_tiles * num_col_tiles < 2:
        if b >= 64:
            row_tile = _round_up(pl.cdiv(b, 2), 32)
            num_row_tiles = pl.cdiv(b, row_tile)
        elif num_col_tiles == 1 and c % 256 == 0:
            col_tile = c // 2
            num_col_tiles = 2

    needs_mask = (b % row_tile) != 0

    kernel = functools.partial(
        _asl_kernel,
        gamma_neg=float(gamma_neg), gamma_pos=float(gamma_pos),
        clip=clip, eps=eps, n_rows=b, row_tile=row_tile,
        needs_mask=needs_mask, binary_targets=binary_targets,
        from_logits=from_logits,
    )

    # TODO(synk): if profiling ever shows exposed DMA, add
    # pipeline_mode=pl.Buffered(3) on the two input BlockSpecs.
    partials = pl.pallas_call(
        kernel,
        out_shape=jax.ShapeDtypeStruct((num_row_tiles, 8, c), jnp.float32),
        grid_spec=pltpu.PrefetchScalarGridSpec(
            num_scalar_prefetch=0,
            grid=(num_row_tiles, num_col_tiles),
            in_specs=[
                pl.BlockSpec((row_tile, col_tile), lambda i, j: (i, j)),
                pl.BlockSpec((row_tile, col_tile), lambda i, j: (i, j)),
            ],
            out_specs=pl.BlockSpec((1, 8, col_tile), lambda i, j: (i, 0, j)),
        ),
        compiler_params=pltpu.CompilerParams(
            dimension_semantics=("parallel", "parallel"),
            vmem_limit_bytes=_vmem_limit_bytes(),
        ),
    )(x, y)
    return jnp.sum(partials)


def asymmetric_loss_ref(x, y, *, gamma_neg=GAMMA_NEG, gamma_pos=GAMMA_POS,
                        clip=CLIP, eps=EPS):
    """Pure-JAX reference mirroring the PyTorch forward exactly."""
    x = x.astype(jnp.float32)
    y = y.astype(jnp.float32)
    xs_pos = x
    xs_neg = 1.0 - x
    if clip is not None and clip > 0:
        xs_neg = jnp.minimum(xs_neg + clip, 1.0)
    los_pos = y * jnp.log(jnp.clip(xs_pos, eps, 1.0 - eps))
    los_neg = (1.0 - y) * jnp.log(jnp.clip(xs_neg, eps, 1.0 - eps))
    loss = los_pos + los_neg
    if gamma_neg > 0 or gamma_pos > 0:
        pt = xs_pos * y + xs_neg * (1.0 - y)
        g = gamma_pos * y + gamma_neg * (1.0 - y)
        loss = loss * jnp.power(1.0 - pt, g)
    return -jnp.sum(loss)


# TODO(synk): PyTorch's disable_torch_grad_focal_loss only changes the backward
# (detaches the focal weight); a future custom VJP must decide whether to match.

if __name__ == "__main__":
    key = jax.random.PRNGKey(0)
    k1, k2, k3, k4, k5, k6 = jax.random.split(key, 6)

    # Test 1: f32 probabilities, batch divisible by 8 (single tile, no mask).
    b1, c1 = 16, 128
    x1 = jax.nn.sigmoid(jax.random.normal(k1, (b1, c1), dtype=jnp.float32))
    y1 = (jax.random.uniform(k2, (b1, c1)) < 0.3).astype(jnp.float32)
    out1 = jax.block_until_ready(asymmetric_loss(x1, y1))
    ref1 = asymmetric_loss_ref(x1, y1)
    assert jnp.allclose(out1, ref1, rtol=1e-4, atol=1e-2), (out1, ref1)

    # Test 2: ragged batch (partial last block + row mask), narrow dtypes
    # (bf16 probabilities + int8 targets) and a C split for megacore.
    b2, c2 = 50, 256
    x2 = jax.nn.sigmoid(jax.random.normal(k3, (b2, c2))).astype(jnp.bfloat16)
    y2 = (jax.random.uniform(k4, (b2, c2)) < 0.3).astype(jnp.int8)
    out2 = jax.block_until_ready(asymmetric_loss(x2, y2))
    ref2 = asymmetric_loss_ref(x2, y2)
    assert jnp.allclose(out2, ref2, rtol=1e-4, atol=1e-2), (out2, ref2)

    # Test 3: logits input with the sigmoid fused into the kernel.
    b3, c3 = 40, 128
    logits = jax.random.normal(k5, (b3, c3), dtype=jnp.float32)
    y3 = (jax.random.uniform(k6, (b3, c3)) < 0.3).astype(jnp.int8)
    out3 = jax.block_until_ready(asymmetric_loss(logits, y3, from_logits=True))
    ref3 = asymmetric_loss_ref(jax.nn.sigmoid(logits), y3)
    assert jnp.allclose(out3, ref3, rtol=1e-4, atol=1e-2), (out3, ref3)

    print("KERNEL_OK")
</pallas_src>

<mosaic_0001>
module attributes {stable_mosaic.version = 11 : i64} {
  func.func @_asl_kernel(%arg0: i32, %arg1: i32, %arg2: memref<16x128xf32, #tpu.memory_space<vmem>>, %arg3: memref<16x128xf32, #tpu.memory_space<vmem>>, %arg4: memref<1x8x128xf32, #tpu.memory_space<vmem>>) attributes {dimension_semantics = [#tpu.dimension_semantics<parallel>, #tpu.dimension_semantics<parallel>], iteration_bounds = array<i64: 1, 1>, scalar_prefetch = 0 : i64, scratch_operands = 0 : i64, tpu.core_type = #tpu.core_type<tc>, window_params = [{transform_indices = @transform_0, window_bounds = array<i64: 16, 128>}, {transform_indices = @transform_1, window_bounds = array<i64: 16, 128>}, {transform_indices = @transform_2, window_bounds = array<i64: 1, 8, 128>}]} {
    %c0 = arith.constant 0 : index
    %c0_0 = arith.constant 0 : index
    %0 = vector.load %arg2[%c0, %c0_0] : memref<16x128xf32, #tpu.memory_space<vmem>>, vector<16x128xf32>
    %cst = arith.constant 1.000000e+00 : f32
    %1 = vector.broadcast %cst : f32 to vector<16x128xf32>
    %2 = arith.subf %1, %0 : vector<16x128xf32>
    %cst_1 = arith.constant 5.000000e-02 : f32
    %3 = vector.broadcast %cst_1 : f32 to vector<16x128xf32>
    %4 = arith.addf %2, %3 : vector<16x128xf32>
    %cst_2 = arith.constant 1.000000e+00 : f32
    %5 = vector.broadcast %cst_2 : f32 to vector<16x128xf32>
    %6 = arith.minimumf %4, %5 : vector<16x128xf32>
    %c0_3 = arith.constant 0 : index
    %c0_4 = arith.constant 0 : index
    %7 = vector.load %arg3[%c0_3, %c0_4] : memref<16x128xf32, #tpu.memory_space<vmem>>, vector<16x128xf32>
    %cst_5 = arith.constant 0.000000e+00 : f32
    %8 = vector.broadcast %cst_5 : f32 to vector<16x128xf32>
    %9 = arith.cmpf ogt, %7, %8 : vector<16x128xf32>
    %10 = arith.select %9, %0, %6 : vector<16x128xi1>, vector<16x128xf32>
    %cst_6 = arith.constant 9.99999993E-9 : f32
    %11 = vector.broadcast %cst_6 : f32 to vector<16x128xf32>
    %12 = arith.maximumf %10, %11 : vector<16x128xf32>
    %13 = math.log %12 : vector<16x128xf32>
    %cst_7 = arith.constant 1.000000e+00 : f32
    %14 = vector.broadcast %cst_7 : f32 to vector<16x128xf32>
    %15 = arith.subf %14, %10 : vector<16x128xf32>
    %16 = arith.mulf %15, %15 : vector<16x128xf32>
    %17 = arith.select %9, %15, %16 : vector<16x128xi1>, vector<16x128xf32>
    %18 = arith.mulf %13, %17 : vector<16x128xf32>
    %19 = vector.shape_cast %18 : vector<16x128xf32> to vector<2x8x128xf32>
    %cst_8 = arith.constant dense<0.000000e+00> : vector<8x128xf32>
    %20 = vector.multi_reduction <add>, %19, %cst_8 [0] : vector<2x8x128xf32> to vector<8x128xf32>
    %cst_9 = arith.constant 0.000000e+00 : f32
    %21 = vector.broadcast %cst_9 : f32 to vector<8x128xf32>
    %22 = arith.subf %21, %20 : vector<8x128xf32>
    %c0_10 = arith.constant 0 : index
    %c0_11 = arith.constant 0 : index
    %c0_12 = arith.constant 0 : index
    %23 = vector.load %arg4[%c0_10, %c0_11, %c0_12] : memref<1x8x128xf32, #tpu.memory_space<vmem>>, vector<1x8x128xf32>
    %24 = vector.shape_cast %23 : vector<1x8x128xf32> to vector<8x128xf32>
    %25 = vector.shape_cast %22 : vector<8x128xf32> to vector<1x8x128xf32>
    tpu.vector_store %arg4[%c0_10, %c0_11, %c0_12], %25 {strides = array<i32>} : memref<1x8x128xf32, #tpu.memory_space<vmem>>, vector<1x8x128xf32>,
    return
  }
  func.func @transform_0(%arg0: i32, %arg1: i32) -> (i32, i32) {
    %c0_i32 = arith.constant 0 : i32
    return %arg0, %arg1 : i32, i32
  }
  func.func @transform_1(%arg0: i32, %arg1: i32) -> (i32, i32) {
    %c0_i32 = arith.constant 0 : i32
    return %arg0, %arg1 : i32, i32
  }
  func.func @transform_2(%arg0: i32, %arg1: i32) -> (i32, i32, i32) {
    %c0_i32 = arith.constant 0 : i32
    %c0_i32_0 = arith.constant 0 : i32
    return %arg0, %c0_i32, %arg1 : i32, i32, i32
  }
}

</mosaic_0001>

<llo_original>
// kernel: tpu_custom_call.1
$region0: #{tpu_custom_call.1}
  #allocation0 [shape = 'u32[]', space=smem, size = 0x4, offset = 0x4, fixed_abs, tag = 'smem constant byte address 0x4 - core index']
  #allocation1 [shape = 'u32[144,128]{1,0:T(1,128)}', space=vmem, size = 0x12000, scoped, tag = 'internal scratch']
  %s0 = inlined_call_operand.hbm [shape: f32[16,128], index: 0, kind: input, shape index: {}]
  %s1 = inlined_call_operand.hbm [shape: f32[16,128], index: 1, kind: input, shape index: {}]
  %s2 = inlined_call_operand.hbm [shape: f32[1,8,128], index: 2, kind: output, shape index: {}]
  %s3 = sld [smem:[#allocation0]]
  $region26: #{tpu_custom_call.1} parent=0
    _
  %s5 = ssub.s32 1, %s3
  %s6 = scalar_select 0, %s5, %s3
  $region1: #{tpu_custom_call.1} parent=0
    #allocation2 [shape = 'u8[8192]{0}', space=vmem, size = 0x2000, scoped, tag = 'input window, operand 0, single buffered']
    #allocation3 [shape = 's32[1]{0}', space=sflag, size = 0x4, scoped, tag = 'scoped memory for tpu_custom_call.1']
    #allocation4 [shape = 's32[1]{0}', space=sflag, size = 0x4, scoped, tag = 'scoped memory for tpu_custom_call.1']
    #allocation5 [shape = 'u8[8192]{0}', space=vmem, size = 0x2000, scoped, tag = 'input window, operand 1, single buffered']
    #allocation6 [shape = 's32[1]{0}', space=sflag, size = 0x4, scoped, tag = 'scoped memory for tpu_custom_call.1']
    #allocation7 [shape = 'u8[4096]{0}', space=vmem, size = 0x1000, scoped, tag = 'output window, operand 0, single buffered']
    %7 = vsyncpa [#allocation3], 0
    %8 = vsyncpa [#allocation6], 0
    %9 = vsyncpa [#allocation4], 0
    // Predicated region
    $region2: #{tpu_custom_call.1} parent=1 // pred_check
      _
    $region3: #{tpu_custom_call.1} parent=1 // pred_check_branch
      %11 = sbr.rel (0) target = $region5
    $region4: #{tpu_custom_call.1} parent=1 // pred_region
      %s13 = ssub.s32 256, 256
      %14 = vsyncadd [#allocation3], %s13
      %s15 = sshll.u32 [#allocation2], 4
      %s16 = int_to_ptr.vmem [resolvable:$true] %s15
      %21 = dma.hbm_to_vmem [thread:$0]  %s0, 256, %s16, [#allocation3], 128, 128, 8
    $region5: #{tpu_custom_call.1} parent=1 // pred_fallthru
      _
    // Predicated region
    $region6: #{tpu_custom_call.1} parent=1 // pred_check
      _
    $region7: #{tpu_custom_call.1} parent=1 // pred_check_branch
      %23 = sbr.rel (0) target = $region9
    $region8: #{tpu_custom_call.1} parent=1 // pred_region
      %s25 = ssub.s32 256, 256
      %26 = vsyncadd [#allocation6], %s25
      %s27 = sshll.u32 [#allocation5], 4
      %s28 = int_to_ptr.vmem [resolvable:$true] %s27
      %33 = dma.hbm_to_vmem [thread:$0]  %s1, 256, %s28, [#allocation6], 128, 128, 8
    $region9: #{tpu_custom_call.1} parent=1 // pred_fallthru
      _
    // Predicated region
    $region10: #{tpu_custom_call.1} parent=1 // pred_check
      _
    $region11: #{tpu_custom_call.1} parent=1 // pred_check_branch
      %35 = sbr.rel (0) target = $region13
    $region12: #{tpu_custom_call.1} parent=1 // pred_region
      %36 = dma.done [#allocation3], 256
    $region13: #{tpu_custom_call.1} parent=1 // pred_fallthru
      _
    // Predicated region
    $region14: #{tpu_custom_call.1} parent=1 // pred_check
      _
    $region15: #{tpu_custom_call.1} parent=1 // pred_check_branch
      %38 = sbr.rel (0) target = $region17
    $region16: #{tpu_custom_call.1} parent=1 // pred_region
      %39 = dma.done [#allocation6], 256
    $region17: #{tpu_custom_call.1} parent=1 // pred_fallthru
      _
    %v40 = vld [vmem:[#allocation2] sm:$0xff]
    %v41 = vld [vmem:[#allocation2 + $0x8] sm:$0xff]
    %v42 = vsub.f32 1.0, %v40
    %v43 = vsub.f32 1.0, %v41
    %v44 = vadd.f32 %v42, 0.05
    %v45 = vadd.f32 %v43, 0.05
    %v46 = vmin.f32 %v44, 1.0
    %v47 = vmin.f32 %v45, 1.0
    %v48 = vld [vmem:[#allocation5] sm:$0xff]
    %v49 = vld [vmem:[#allocation5 + $0x8] sm:$0xff]
    %vm50 = vcmp.gt.f32.partialorder %v48, 0.0
    %vm51 = vcmp.gt.f32.partialorder %v49, 0.0
    %v52 = vsel %vm50, %v40, %v46
    %v53 = vsel %vm51, %v41, %v47
    %v54 = vmax.f32 %v52, 1e-08
    %v55 = vmax.f32 %v53, 1e-08
    %v56 = vlog2.pop %v54
    %v57 = vmul.f32 %v56, 0.6931472
    %v58 = vlog2.pop %v55
    %v59 = vmul.f32 %v58, 0.6931472
    %v60 = vsub.f32 1.0, %v52
    %v61 = vsub.f32 1.0, %v53
    %v62 = vmul.f32 %v60, %v60
    %v63 = vmul.f32 %v61, %v61
    %v64 = vsel %vm50, %v60, %v62
    %v65 = vsel %vm51, %v61, %v63
    %v66 = vmul.f32 %v57, %v64
    %v67 = vmul.f32 %v59, %v65
    %v68 = vadd.f32 %v66, %v67
    %v69 = vsub.f32 0.0, %v68
    %70 = vst [vmem:[#allocation7] sm:$0xff] %v69
    // Predicated region
    $region18: #{tpu_custom_call.1} parent=1 // pred_check
      _
    $region19: #{tpu_custom_call.1} parent=1 // pred_check_branch
      %72 = sbr.rel (0) target = $region21
    $region20: #{tpu_custom_call.1} parent=1 // pred_region
      %s74 = ssub.s32 128, 128
      %75 = vsyncadd [#allocation4], %s74
      %s77 = sshll.u32 [#allocation7], 4
      %s78 = int_to_ptr.vmem [resolvable:$true] %s77
      %80 = dma.vmem_to_hbm [thread:$0]  %s78, 128, %s2, [#allocation4]
    $region21: #{tpu_custom_call.1} parent=1 // pred_fallthru
      _
    // Predicated region
    $region22: #{tpu_custom_call.1} parent=1 // pred_check
      _
    $region23: #{tpu_custom_call.1} parent=1 // pred_check_branch
      %82 = sbr.rel (0) target = $region25
    $region24: #{tpu_custom_call.1} parent=1 // pred_region
      %83 = dma.done [#allocation4], 128
    $region25: #{tpu_custom_call.1} parent=1 // pred_fallthru
      _
    %84 = vsyncpa [#allocation3], 1
    %85 = vsyncpa [#allocation6], 1
    %86 = vsyncpa [#allocation4], 1

</llo_original>
